<compile_context>
chip_gen: v5e
topology: v5e:2x2
jax: 0.10.0
libtpu: 0.0.40
codegen_flags: <defaults>
</compile_context>

<pallas_src>
import math

import jax
import jax.numpy as jnp
from jax.experimental import pallas as pl
from jax.experimental.pallas import tpu as pltpu

# ---- ScConv hyper-parameters (op_channel chosen so every conv in the module is valid) --
OP_CHANNEL = 8
GROUP_NUM = 4
GATE_THRESHOLD = 0.5
ALPHA = 0.5
SQUEEZE_RADIO = 2
GROUP_SIZE = 2
GROUP_KERNEL_SIZE = 3
GN_EPS = 1e-10

UP_CH = int(ALPHA * OP_CHANNEL)           # 4
LOW_CH = OP_CHANNEL - UP_CH               # 4
UP_SQ = UP_CH // SQUEEZE_RADIO            # 2
LOW_SQ = LOW_CH // SQUEEZE_RADIO          # 2

assert OP_CHANNEL % GROUP_NUM == 0
assert UP_SQ == GROUP_SIZE                # GWC has in_channels/groups == 1 here

# sigmoid(t) >= thr  <=>  t >= logit(thr)  (sigmoid strictly monotone) -> no slab sigmoid
GATE_LOGIT = float(math.log(GATE_THRESHOLD / (1.0 - GATE_THRESHOLD)))   # == 0.0

# ---- layout of the fused (C, 128) weight slab -------------------------------------------
_COL_GNW, _COL_GNB, _COL_WGAM, _COL_BRB, _COL_GWCB = 0, 1, 2, 3, 4
_OFF_BR1, _OFF_BR2 = 8, 16
_OFF_MC, _OFF_M2, _OFF_MPR, _OFF_MNX = 24, 32, 40, 48
_OFF_GMU, _OFF_GVA = 56, 64
_WSLAB_COLS = 128


def _erf(v, recip=None):
    """Abramowitz-Stegun 7.1.26 erf (max abs err ~1.5e-7 == exact GELU at f32)."""
    if recip is None:
        recip = lambda d: 1.0 / d
    a1, a2, a3, a4, a5 = (0.254829592, -0.284496736, 1.421413741,
                          -1.453152027, 1.061405429)
    p = 0.3275911
    av = jnp.abs(v)
    t = recip(1.0 + p * av)
    poly = ((((a5 * t + a4) * t + a3) * t + a2) * t + a1) * t
    e = 1.0 - poly * jnp.exp(-av * av)
    return jnp.where(v >= 0.0, e, -e)


def _recip_eup(x):
    """EUP approximate reciprocal + one Newton step: ~f32-accurate, keeps the divide off
    the saturated VALU slots.  Kernel-only (pl.reciprocal)."""
    r = pl.reciprocal(x, approx=True)
    return r * (2.0 - x * r)


# ------------------------------------------------------------------------------------
# Kernel
# ------------------------------------------------------------------------------------
def _make_kernel(L, NB):
    C = OP_CHANNEL
    NBL = NB * L
    inv_L = 1.0 / L

    def kernel(x_ref, w_ref, s_ref, st_ref, em_ref, o_ref):
        f32 = jnp.float32
        x = x_ref[...]                                     # (C, NBL) pre-scrambled input
        S = s_ref[...]                                     # (NBL, NB) 0/1 lane -> batch
        St = st_ref[...]                                   # (NB, NBL) 0/1 batch -> lane
        mask_nf = em_ref[0:C, :]                           # 0 where each batch's l == 0
        mask_nl = em_ref[C:2 * C, :]                       # 0 where each batch's l == L-1

        gn_w = w_ref[:, _COL_GNW:_COL_GNW + 1]             # (C, 1)
        gn_b = w_ref[:, _COL_GNB:_COL_GNB + 1]
        w_gam = w_ref[:, _COL_WGAM:_COL_WGAM + 1]          # gn_w / sum(gn_w)
        br_b = w_ref[:, _COL_BRB:_COL_BRB + 1]
        gwc_b = w_ref[:, _COL_GWCB:_COL_GWCB + 1]
        br1 = w_ref[:, _OFF_BR1:_OFF_BR1 + C]              # bridge on x1
        br2 = w_ref[:, _OFF_BR2:_OFF_BR2 + C]              # bridge on x2 (swap folded in)
        m_c = w_ref[:, _OFF_MC:_OFF_MC + C]                # GWC center + PWC1 (w/ squeeze)
        m_2 = w_ref[:, _OFF_M2:_OFF_M2 + C]                # y2 = [PWC2 @ low_s ; low_s]
        m_pr = w_ref[:, _OFF_MPR:_OFF_MPR + C]             # GWC prev tap
        m_nx = w_ref[:, _OFF_MNX:_OFF_MNX + C]             # GWC next tap
        gm_mu = w_ref[:, _OFF_GMU:_OFF_GMU + C]            # same-group mask / n_elem
        gm_va = w_ref[:, _OFF_GVA:_OFF_GVA + C]            # same-group mask / (n_elem-1)

        # ---------------- SRU: GroupBatchnorm2d (scramble baked into the wrapper layout)
        sum1 = jnp.dot(x, S, preferred_element_type=f32)                 # (C, NB)
        gmean = jnp.dot(gm_mu, sum1, preferred_element_type=f32)         # (C, NB)
        d = x - jnp.dot(gmean, St, preferred_element_type=f32)           # (C, NBL)
        sumd2 = jnp.dot(d * d, S, preferred_element_type=f32)            # (C, NB)
        gvar = jnp.dot(gm_va, sumd2, preferred_element_type=f32)         # (C, NB) unbiased
        scale = gn_w / (jnp.sqrt(gvar) + GN_EPS)                         # tiny -> exact div
        gn = d * jnp.dot(scale, St, preferred_element_type=f32) + gn_b   # (C, NBL)

        # SRU gate: sigmoid(gn*w_gamma) >= 0.5  <=>  gn*w_gamma >= 0  (exact, no sigmoid)
        x1 = jnp.where(gn * w_gam >= GATE_LOGIT, gn, 0.0)                # info part
        x2 = gn - x1                                                     # non-info part

        # ---------------- bridge: 1x1 conv (+bias) + exact GELU (erf) -------------------
        z = (jnp.dot(br1, x1, preferred_element_type=f32)
             + jnp.dot(br2, x2, preferred_element_type=f32) + br_b)
        y = 0.5 * z * (1.0 + _erf(z * 0.7071067811865476, recip=_recip_eup))

        # ---------------- CRU: squeeze + GWC/PWC1/PWC2 as four pre-composed (C,C) dots --
        y1 = jnp.dot(m_c, y, preferred_element_type=f32) + gwc_b
        t = jnp.dot(m_pr, y, preferred_element_type=f32)                 # prev tap
        y1 = y1 + pltpu.roll(t, 1, 1) * mask_nf                          # shift +1 lane
        t = jnp.dot(m_nx, y, preferred_element_type=f32)                 # next tap
        y1 = y1 + pltpu.roll(t, NBL - 1, 1) * mask_nl                    # shift -1 lane
        y2 = jnp.dot(m_2, y, preferred_element_type=f32)

        # ---------------- adaptive avg pool + softmax over 2C channels + reweight -------
        p1 = jnp.dot(y1, S, preferred_element_type=f32) * inv_L          # (C, NB)
        p2 = jnp.dot(y2, S, preferred_element_type=f32) * inv_L
        pm = jnp.maximum(jnp.max(p1, axis=0, keepdims=True),
                         jnp.max(p2, axis=0, keepdims=True))             # (1, NB)
        e1 = jnp.exp(p1 - pm)
        e2 = jnp.exp(p2 - pm)
        inv_den = _recip_eup(jnp.sum(e1, axis=0, keepdims=True)
                             + jnp.sum(e2, axis=0, keepdims=True))
        w1 = jnp.dot(e1 * inv_den, St, preferred_element_type=f32)       # (C, NBL)
        w2 = jnp.dot(e2 * inv_den, St, preferred_element_type=f32)
        o_ref[...] = w1 * y1 + w2 * y2                                   # chunk(2).sum()

    return kernel


# ------------------------------------------------------------------------------------
# Host-side constant packing (parameter-only; tiny, fused under jit)
# ------------------------------------------------------------------------------------
def _pack_params(params, L):
    """All weights/biases/group matrices fused into one (C, 128) f32 slab."""
    gn_w, gn_b, br_w, br_b, sq1_w, sq2_w, gwc_w, gwc_b, pwc1_w, pwc2_w = params
    C = OP_CHANNEL
    f32 = jnp.float32
    gn_w = gn_w.astype(f32).reshape(C, 1)
    gn_b = gn_b.astype(f32).reshape(C, 1)
    br_w = br_w.astype(f32)
    br_b = br_b.astype(f32).reshape(C, 1)
    sq1_w = sq1_w.astype(f32)
    sq2_w = sq2_w.astype(f32)
    gwc_w = gwc_w.astype(f32)
    gwc_b = gwc_b.astype(f32).reshape(C, 1)
    pwc1_w = pwc1_w.astype(f32)
    pwc2_w = pwc2_w.astype(f32)

    w_gamma = gn_w / jnp.sum(gn_w)

    # bridge halves; SRU.reconstruct's half-channel swap folded into br2's columns
    half = C // 2
    perm = jnp.concatenate([jnp.arange(half, C), jnp.arange(0, half)])
    br1, br2 = br_w, br_w[:, perm]

    # CRU: compose squeeze1/2 with GWC taps / PWC1 / PWC2 into four (C, C) matrices
    sq_bd = jnp.zeros((UP_SQ + LOW_SQ, C), f32)
    sq_bd = sq_bd.at[:UP_SQ, :UP_CH].set(sq1_w)
    sq_bd = sq_bd.at[UP_SQ:, UP_CH:].set(sq2_w)                          # (4, C)
    opg = C // GROUP_SIZE
    sel = (jnp.arange(C)[:, None] // opg == jnp.arange(UP_SQ)[None, :]).astype(f32)
    zlow = jnp.zeros((C, LOW_SQ), f32)
    a_c = jnp.concatenate([gwc_w[:, 1:2] * sel + pwc1_w, zlow], axis=1)
    a_2 = jnp.concatenate(
        [jnp.concatenate([jnp.zeros((C - LOW_SQ, UP_SQ), f32), pwc2_w], axis=1),
         jnp.concatenate([jnp.zeros((LOW_SQ, UP_SQ), f32),
                          jnp.eye(LOW_SQ, dtype=f32)], axis=1)], axis=0)
    a_pr = jnp.concatenate([gwc_w[:, 0:1] * sel, zlow], axis=1)
    a_nx = jnp.concatenate([gwc_w[:, 2:3] * sel, zlow], axis=1)
    m_c, m_2, m_pr, m_nx = [a @ sq_bd for a in (a_c, a_2, a_pr, a_nx)]

    # group mean / variance aggregation matrices with the 1/n, 1/(n-1) scalars folded in
    Cg = C // GROUP_NUM
    n_elem = Cg * L
    gidx = jnp.arange(C) // Cg
    Gm = (gidx[:, None] == gidx[None, :]).astype(f32)
    gm_mu = Gm * (1.0 / n_elem)
    gm_va = Gm * (1.0 / (n_elem - 1))

    slab = jnp.zeros((C, _WSLAB_COLS), f32)
    slab = slab.at[:, _COL_GNW].set(gn_w[:, 0])
    slab = slab.at[:, _COL_GNB].set(gn_b[:, 0])
    slab = slab.at[:, _COL_WGAM].set(w_gamma[:, 0])
    slab = slab.at[:, _COL_BRB].set(br_b[:, 0])
    slab = slab.at[:, _COL_GWCB].set(gwc_b[:, 0])
    slab = slab.at[:, _OFF_BR1:_OFF_BR1 + C].set(br1)
    slab = slab.at[:, _OFF_BR2:_OFF_BR2 + C].set(br2)
    slab = slab.at[:, _OFF_MC:_OFF_MC + C].set(m_c)
    slab = slab.at[:, _OFF_M2:_OFF_M2 + C].set(m_2)
    slab = slab.at[:, _OFF_MPR:_OFF_MPR + C].set(m_pr)
    slab = slab.at[:, _OFF_MNX:_OFF_MNX + C].set(m_nx)
    slab = slab.at[:, _OFF_GMU:_OFF_GMU + C].set(gm_mu)
    slab = slab.at[:, _OFF_GVA:_OFF_GVA + C].set(gm_va)
    return slab


def _make_masks(NB, L):
    """Grid-invariant segment matrices and conv edge masks (constant-folded under jit)."""
    C = OP_CHANNEL
    NBL = NB * L
    f32 = jnp.float32
    bidx = jnp.arange(NBL, dtype=jnp.int32) // L
    S = (bidx[:, None] == jnp.arange(NB, dtype=jnp.int32)[None, :]).astype(f32)   # (NBL,NB)
    St = S.T                                                                      # (NB,NBL)
    pos = jnp.arange(NBL, dtype=jnp.int32) % L
    m_nf = jnp.broadcast_to((pos != 0).astype(f32), (C, NBL))
    m_nl = jnp.broadcast_to((pos != L - 1).astype(f32), (C, NBL))
    emask = jnp.concatenate([m_nf, m_nl], axis=0)                                 # (2C,NBL)
    return S, St, emask


def _choose_block(n, l, max_lanes=4096):
    """Pick NB (batch per grid step): NB*l a multiple of 128 (unmasked stores), NB*l <=
    max_lanes (bounds the (NB*l, NB) segment-matrix VMEM), and, when the batch allows,
    at least 2 grid steps so v7x's two TensorCores both get work.  Returns (NB, N_pad)."""
    nb0 = 128 // math.gcd(l, 128)                     # minimal NB with NB*l % 128 == 0
    cap = max(nb0, (max_lanes // (nb0 * l)) * nb0)    # largest NB within the lane budget
    half = -(-n // 2)                                 # ceil(n/2)
    half = -(-half // nb0) * nb0                      # ... rounded up to a multiple of nb0
    nb = min(cap, max(nb0, half))
    n_pad = -(-n // nb) * nb
    return nb, n_pad


# ------------------------------------------------------------------------------------
# Forward wrapper
# ------------------------------------------------------------------------------------
def scconv_forward(x_nchw, params, block_batch=None):
    N, C, H, W = x_nchw.shape
    assert W == 1, "GroupBatchnorm2d's view requires the last spatial dim to be 1"
    assert C == OP_CHANNEL
    L = H
    G, Cg = GROUP_NUM, C // GROUP_NUM

    x = x_nchw.reshape(N, C, L).astype(jnp.float32)
    # GroupBatchnorm2d's permute/view round trip scrambles elements WITHIN each channel
    # group; bake that scramble into the same layout pass that builds the lane-merged
    # (C, N*L) slab.
    # TODO(synk): in a full model keep activations in this (C, N*L) layout across ops so
    # the two wrapper-side HBM transposes (in and out) disappear entirely.
    xs = x.reshape(N, G, Cg, L).swapaxes(2, 3).reshape(N, C, L)
    x2d = jnp.transpose(xs, (1, 0, 2)).reshape(C, N * L)

    if block_batch is None:
        NB, N_pad = _choose_block(N, L)
    else:
        NB = int(block_batch)
        assert (NB * L) % 128 == 0, "block_batch*L must be a multiple of 128"
        N_pad = -(-N // NB) * NB
    if N_pad != N:                     # pad whole (zero) batch elems: stores stay unmasked
        x2d = jnp.pad(x2d, ((0, 0), (0, (N_pad - N) * L)))
    NBL = NB * L
    grid = (N_pad // NB,)

    wslab = _pack_params(params, L)
    S, St, emask = _make_masks(NB, L)

    # explicit scoped-VMEM budget: io blocks (double-buffered) + resident constants +
    # ~12 live (C, NBL) intermediates; clamp to v7x's 64 MiB physical VMEM.
    est = 4 * (2 * 2 * C * NBL
               + 2 * (2 * NBL * NB + 2 * C * NBL + C * _WSLAB_COLS)
               + 12 * C * NBL)
    vmem_limit = int(min(64 * 2 ** 20, max(32 * 2 ** 20, 2 * est)))

    out2d = pl.pallas_call(
        _make_kernel(L, NB),
        out_shape=jax.ShapeDtypeStruct((C, N_pad * L), jnp.float32),
        grid=grid,
        in_specs=[
            pl.BlockSpec((C, NBL), lambda i: (0, i)),            # activations (lane-dense)
            pl.BlockSpec((C, _WSLAB_COLS), lambda i: (0, 0)),    # fused weight slab
            pl.BlockSpec((NBL, NB), lambda i: (0, 0)),           # lane -> batch matrix
            pl.BlockSpec((NB, NBL), lambda i: (0, 0)),           # batch -> lane matrix
            pl.BlockSpec((2 * C, NBL), lambda i: (0, 0)),        # conv edge masks
        ],
        out_specs=pl.BlockSpec((C, NBL), lambda i: (0, i)),
        compiler_params=pltpu.CompilerParams(
            dimension_semantics=("parallel",),
            vmem_limit_bytes=vmem_limit),
    )(x2d, wslab, S, St, emask)

    out = out2d[:, :N * L].reshape(C, N, L).transpose(1, 0, 2).reshape(N, C, H, 1)
    return out


# ------------------------------------------------------------------------------------
# Pure-JAX mirror of the PyTorch forward (numerical cross-check)
# ------------------------------------------------------------------------------------
def scconv_reference(x_nchw, params):
    gn_w, gn_b, br_w, br_b, sq1_w, sq2_w, gwc_w, gwc_b, pwc1_w, pwc2_w = params
    N, C, L, _ = x_nchw.shape
    G, Cg = GROUP_NUM, C // GROUP_NUM
    x = x_nchw.astype(jnp.float32)
    # GroupBatchnorm2d exactly as torch's permute/view chain (W == 1)
    t = jnp.transpose(x, (0, 2, 3, 1)).reshape(N, L, G, Cg)
    t = jnp.transpose(t, (0, 2, 1, 3)).reshape(N, G, -1)
    mean = jnp.mean(t, axis=2, keepdims=True)
    std = jnp.std(t, axis=2, keepdims=True, ddof=1)
    t = (t - mean) / (std + GN_EPS)
    gn = t.reshape(N, C, L, 1) * gn_w.reshape(1, C, 1, 1) + gn_b.reshape(1, C, 1, 1)
    w_gamma = (gn_w / jnp.sum(gn_w)).reshape(1, C, 1, 1)
    rw = jax.nn.sigmoid(gn * w_gamma)
    x1 = jnp.where(rw >= GATE_THRESHOLD, gn, 0.0)
    x2 = jnp.where(rw >= GATE_THRESHOLD, 0.0, gn)
    h = C // 2
    sru = jnp.concatenate([x1[:, :h] + x2[:, h:], x1[:, h:] + x2[:, :h]], axis=1)
    s2 = sru[..., 0]                                      # (N, C, L)
    z = jnp.einsum('oc,ncl->nol', br_w, s2) + br_b.reshape(1, C, 1)
    y = 0.5 * z * (1.0 + _erf(z * 0.7071067811865476))
    up, low = y[:, :UP_CH], y[:, UP_CH:]
    up_s = jnp.einsum('oc,ncl->nol', sq1_w, up)
    low_s = jnp.einsum('oc,ncl->nol', sq2_w, low)
    up_sel = jnp.repeat(up_s, C // GROUP_SIZE, axis=1)
    pad = jnp.pad(up_sel, ((0, 0), (0, 0), (1, 1)))
    gwc = (gwc_w[:, 0].reshape(1, C, 1) * pad[:, :, 0:L]
           + gwc_w[:, 1].reshape(1, C, 1) * pad[:, :, 1:L + 1]
           + gwc_w[:, 2].reshape(1, C, 1) * pad[:, :, 2:L + 2]
           + gwc_b.reshape(1, C, 1))
    pwc1 = jnp.einsum('oc,ncl->nol', pwc1_w, up_s)
    y1 = gwc + pwc1
    pwc2 = jnp.einsum('oc,ncl->nol', pwc2_w, low_s)
    y2 = jnp.concatenate([pwc2, low_s], axis=1)
    out = jnp.concatenate([y1, y2], axis=1)
    pooled = jnp.mean(out, axis=2, keepdims=True)
    wts = jax.nn.softmax(pooled, axis=1)
    out = wts * out
    res = out[:, :C] + out[:, C:]
    return res.reshape(N, C, L, 1)


if __name__ == "__main__":
    C = OP_CHANNEL
    key = jax.random.PRNGKey(0)
    ks = jax.random.split(key, 10)

    # Deterministic synthetic parameters (shapes match the nn.Module __init__).
    gn_w = jax.random.normal(ks[0], (C, 1), jnp.float32)                 # torch.randn init
    gn_b = jnp.zeros((C, 1), jnp.float32)
    br_w = 0.3 * jax.random.normal(ks[1], (C, C), jnp.float32)           # bridge 1x1 conv
    br_b = 0.1 * jax.random.normal(ks[2], (C, 1), jnp.float32)
    sq1_w = 0.3 * jax.random.normal(ks[3], (UP_SQ, UP_CH), jnp.float32)
    sq2_w = 0.3 * jax.random.normal(ks[4], (LOW_SQ, LOW_CH), jnp.float32)
    gwc_w = 0.3 * jax.random.normal(ks[5], (C, GROUP_KERNEL_SIZE), jnp.float32)  # (8,1,3,1)
    gwc_b = 0.1 * jax.random.normal(ks[6], (C, 1), jnp.float32)
    pwc1_w = 0.3 * jax.random.normal(ks[7], (C, UP_SQ), jnp.float32)
    pwc2_w = 0.3 * jax.random.normal(ks[8], (C - LOW_SQ, LOW_SQ), jnp.float32)
    params = (gn_w, gn_b, br_w, br_b, sq1_w, sq2_w, gwc_w, gwc_b, pwc1_w, pwc2_w)

    # Input: NCHW with W == 1 (required by GroupBatchnorm2d's view chain).
    N, H = 16, 16
    x = jax.random.normal(ks[9], (N, C, H, 1), jnp.float32)

    fwd = jax.jit(scconv_forward, static_argnames=("block_batch",))
    y = fwd(x, params)                 # auto-pick: NB=8 -> 128-lane blocks, grid=(2,)
    jax.block_until_ready(y)
    assert y.shape == x.shape

    y_ref = scconv_reference(x, params)
    assert bool(jnp.allclose(y, y_ref, atol=2e-3, rtol=2e-3)), "kernel != reference"

    print("KERNEL_OK")
</pallas_src>

<mosaic_0001>
module attributes {stable_mosaic.version = 11 : i64} {
  func.func @kernel(%arg0: i32, %arg1: memref<8x128xf32, #tpu.memory_space<vmem>>, %arg2: memref<8x128xf32, #tpu.memory_space<vmem>>, %arg3: memref<128x8xf32, #tpu.memory_space<vmem>>, %arg4: memref<8x128xf32, #tpu.memory_space<vmem>>, %arg5: memref<16x128xf32, #tpu.memory_space<vmem>>, %arg6: memref<8x128xf32, #tpu.memory_space<vmem>>) attributes {dimension_semantics = [#tpu.dimension_semantics<parallel>], iteration_bounds = array<i64: 2>, scalar_prefetch = 0 : i64, scratch_operands = 0 : i64, tpu.core_type = #tpu.core_type<tc>, window_params = [{transform_indices = @transform_0, window_bounds = array<i64: 8, 128>}, {pipeline_mode = #tpu.pipeline_mode<synchronous>, transform_indices = @transform_1, window_bounds = array<i64: 8, 128>}, {pipeline_mode = #tpu.pipeline_mode<synchronous>, transform_indices = @transform_2, window_bounds = array<i64: 128, 8>}, {pipeline_mode = #tpu.pipeline_mode<synchronous>, transform_indices = @transform_3, window_bounds = array<i64: 8, 128>}, {pipeline_mode = #tpu.pipeline_mode<synchronous>, transform_indices = @transform_4, window_bounds = array<i64: 16, 128>}, {transform_indices = @transform_5, window_bounds = array<i64: 8, 128>}]} {
    %c0 = arith.constant 0 : index
    %c0_0 = arith.constant 0 : index
    %0 = vector.load %arg1[%c0, %c0_0] : memref<8x128xf32, #tpu.memory_space<vmem>>, vector<8x128xf32>
    %c0_1 = arith.constant 0 : index
    %c0_2 = arith.constant 0 : index
    %1 = vector.load %arg3[%c0_1, %c0_2] : memref<128x8xf32, #tpu.memory_space<vmem>>, vector<128x8xf32>
    %c0_3 = arith.constant 0 : index
    %c0_4 = arith.constant 0 : index
    %2 = vector.load %arg4[%c0_3, %c0_4] : memref<8x128xf32, #tpu.memory_space<vmem>>, vector<8x128xf32>
    %c0_5 = arith.constant 0 : index
    %c0_6 = arith.constant 0 : index
    %3 = vector.load %arg5[%c0_5, %c0_6] : memref<16x128xf32, #tpu.memory_space<vmem>>, vector<8x128xf32>
    %c8 = arith.constant 8 : index
    %c0_7 = arith.constant 0 : index
    %4 = vector.load %arg5[%c8, %c0_7] : memref<16x128xf32, #tpu.memory_space<vmem>>, vector<8x128xf32>
    %c0_8 = arith.constant 0 : index
    %c0_9 = arith.constant 0 : index
    %5 = vector.load %arg2[%c0_8, %c0_9] : memref<8x128xf32, #tpu.memory_space<vmem>>, vector<8x1xf32>
    %c0_10 = arith.constant 0 : index
    %c1 = arith.constant 1 : index
    %6 = vector.load %arg2[%c0_10, %c1] : memref<8x128xf32, #tpu.memory_space<vmem>>, vector<8x1xf32>
    %c0_11 = arith.constant 0 : index
    %c2 = arith.constant 2 : index
    %7 = vector.load %arg2[%c0_11, %c2] : memref<8x128xf32, #tpu.memory_space<vmem>>, vector<8x1xf32>
    %c0_12 = arith.constant 0 : index
    %c3 = arith.constant 3 : index
    %8 = vector.load %arg2[%c0_12, %c3] : memref<8x128xf32, #tpu.memory_space<vmem>>, vector<8x1xf32>
    %c0_13 = arith.constant 0 : index
    %c4 = arith.constant 4 : index
    %9 = vector.load %arg2[%c0_13, %c4] : memref<8x128xf32, #tpu.memory_space<vmem>>, vector<8x1xf32>
    %c0_14 = arith.constant 0 : index
    %c8_15 = arith.constant 8 : index
    %10 = vector.load %arg2[%c0_14, %c8_15] : memref<8x128xf32, #tpu.memory_space<vmem>>, vector<8x8xf32>
    %c0_16 = arith.constant 0 : index
    %c16 = arith.constant 16 : index
    %11 = vector.load %arg2[%c0_16, %c16] : memref<8x128xf32, #tpu.memory_space<vmem>>, vector<8x8xf32>
    %c0_17 = arith.constant 0 : index
    %c24 = arith.constant 24 : index
    %12 = vector.load %arg2[%c0_17, %c24] : memref<8x128xf32, #tpu.memory_space<vmem>>, vector<8x8xf32>
    %c0_18 = arith.constant 0 : index
    %c32 = arith.constant 32 : index
    %13 = vector.load %arg2[%c0_18, %c32] : memref<8x128xf32, #tpu.memory_space<vmem>>, vector<8x8xf32>
    %c0_19 = arith.constant 0 : index
    %c40 = arith.constant 40 : index
    %14 = vector.load %arg2[%c0_19, %c40] : memref<8x128xf32, #tpu.memory_space<vmem>>, vector<8x8xf32>
    %c0_20 = arith.constant 0 : index
    %c48 = arith.constant 48 : index
    %15 = vector.load %arg2[%c0_20, %c48] : memref<8x128xf32, #tpu.memory_space<vmem>>, vector<8x8xf32>
    %c0_21 = arith.constant 0 : index
    %c56 = arith.constant 56 : index
    %16 = vector.load %arg2[%c0_21, %c56] : memref<8x128xf32, #tpu.memory_space<vmem>>, vector<8x8xf32>
    %c0_22 = arith.constant 0 : index
    %c64 = arith.constant 64 : index
    %17 = vector.load %arg2[%c0_22, %c64] : memref<8x128xf32, #tpu.memory_space<vmem>>, vector<8x8xf32>
    %cst = arith.constant dense<0.000000e+00> : vector<8x8xf32>
    %18 = tpu.matmul %0, %1, %cst {dimension_numbers = #tpu.dot_dimension_numbers<[1], [0], [0], [1], [0, 0, 1, 1], [], []>} : vector<8x128xf32>, vector<128x8xf32>, vector<8x8xf32> -> vector<8x8xf32>
    %cst_23 = arith.constant dense<0.000000e+00> : vector<8x8xf32>
    %19 = tpu.matmul %16, %18, %cst_23 {dimension_numbers = #tpu.dot_dimension_numbers<[1], [0], [0], [1], [0, 0, 1, 1], [], []>} : vector<8x8xf32>, vector<8x8xf32>, vector<8x8xf32> -> vector<8x8xf32>
    %cst_24 = arith.constant dense<0.000000e+00> : vector<8x128xf32>
    %20 = tpu.matmul %19, %2, %cst_24 {dimension_numbers = #tpu.dot_dimension_numbers<[1], [0], [0], [1], [0, 0, 1, 1], [], []>} : vector<8x8xf32>, vector<8x128xf32>, vector<8x128xf32> -> vector<8x128xf32>
    %21 = arith.subf %0, %20 : vector<8x128xf32>
    %22 = arith.mulf %21, %21 : vector<8x128xf32>
    %cst_25 = arith.constant dense<0.000000e+00> : vector<8x8xf32>
    %23 = tpu.matmul %22, %1, %cst_25 {dimension_numbers = #tpu.dot_dimension_numbers<[1], [0], [0], [1], [0, 0, 1, 1], [], []>} : vector<8x128xf32>, vector<128x8xf32>, vector<8x8xf32> -> vector<8x8xf32>
    %cst_26 = arith.constant dense<0.000000e+00> : vector<8x8xf32>
    %24 = tpu.matmul %17, %23, %cst_26 {dimension_numbers = #tpu.dot_dimension_numbers<[1], [0], [0], [1], [0, 0, 1, 1], [], []>} : vector<8x8xf32>, vector<8x8xf32>, vector<8x8xf32> -> vector<8x8xf32>
    %25 = math.sqrt %24 : vector<8x8xf32>
    %cst_27 = arith.constant 1.000000e-10 : f32
    %26 = vector.broadcast %cst_27 : f32 to vector<8x8xf32>
    %27 = arith.addf %25, %26 : vector<8x8xf32>
    %28 = vector.broadcast %5 : vector<8x1xf32> to vector<8x8xf32>
    %29 = arith.divf %28, %27 : vector<8x8xf32>
    %cst_28 = arith.constant dense<0.000000e+00> : vector<8x128xf32>
    %30 = tpu.matmul %29, %2, %cst_28 {dimension_numbers = #tpu.dot_dimension_numbers<[1], [0], [0], [1], [0, 0, 1, 1], [], []>} : vector<8x8xf32>, vector<8x128xf32>, vector<8x128xf32> -> vector<8x128xf32>
    %31 = arith.mulf %21, %30 : vector<8x128xf32>
    %32 = vector.broadcast %6 : vector<8x1xf32> to vector<8x128xf32>
    %33 = arith.addf %31, %32 : vector<8x128xf32>
    %34 = vector.broadcast %7 : vector<8x1xf32> to vector<8x128xf32>
    %35 = arith.mulf %33, %34 : vector<8x128xf32>
    %cst_29 = arith.constant 0.000000e+00 : f32
    %36 = vector.broadcast %cst_29 : f32 to vector<8x128xf32>
    %37 = arith.cmpf oge, %35, %36 : vector<8x128xf32>
    %cst_30 = arith.constant 0.000000e+00 : f32
    %38 = vector.broadcast %cst_30 : f32 to vector<8x128xf32>
    %39 = arith.select %37, %33, %38 : vector<8x128xi1>, vector<8x128xf32>
    %40 = arith.subf %33, %39 : vector<8x128xf32>
    %cst_31 = arith.constant dense<0.000000e+00> : vector<8x128xf32>
    %41 = tpu.matmul %10, %39, %cst_31 {dimension_numbers = #tpu.dot_dimension_numbers<[1], [0], [0], [1], [0, 0, 1, 1], [], []>} : vector<8x8xf32>, vector<8x128xf32>, vector<8x128xf32> -> vector<8x128xf32>
    %cst_32 = arith.constant dense<0.000000e+00> : vector<8x128xf32>
    %42 = tpu.matmul %11, %40, %cst_32 {dimension_numbers = #tpu.dot_dimension_numbers<[1], [0], [0], [1], [0, 0, 1, 1], [], []>} : vector<8x8xf32>, vector<8x128xf32>, vector<8x128xf32> -> vector<8x128xf32>
    %43 = arith.addf %41, %42 : vector<8x128xf32>
    %44 = vector.broadcast %8 : vector<8x1xf32> to vector<8x128xf32>
    %45 = arith.addf %43, %44 : vector<8x128xf32>
    %cst_33 = arith.constant 5.000000e-01 : f32
    %46 = vector.broadcast %cst_33 : f32 to vector<8x128xf32>
    %47 = arith.mulf %46, %45 : vector<8x128xf32>
    %cst_34 = arith.constant 0.707106769 : f32
    %48 = vector.broadcast %cst_34 : f32 to vector<8x128xf32>
    %49 = arith.mulf %45, %48 : vector<8x128xf32>
    %50 = math.absf %49 : vector<8x128xf32>
    %cst_35 = arith.constant 0.327591091 : f32
    %51 = vector.broadcast %cst_35 : f32 to vector<8x128xf32>
    %52 = arith.mulf %51, %50 : vector<8x128xf32>
    %cst_36 = arith.constant 1.000000e+00 : f32
    %53 = vector.broadcast %cst_36 : f32 to vector<8x128xf32>
    %54 = arith.addf %53, %52 : vector<8x128xf32>
    %55 = tpu.reciprocal %54 {approx = true} : vector<8x128xf32> -> vector<8x128xf32>
    %56 = arith.mulf %54, %55 : vector<8x128xf32>
    %cst_37 = arith.constant 2.000000e+00 : f32
    %57 = vector.broadcast %cst_37 : f32 to vector<8x128xf32>
    %58 = arith.subf %57, %56 : vector<8x128xf32>
    %59 = arith.mulf %55, %58 : vector<8x128xf32>
    %cst_38 = arith.constant 1.06140542 : f32
    %60 = vector.broadcast %cst_38 : f32 to vector<8x128xf32>
    %61 = arith.mulf %60, %59 : vector<8x128xf32>
    %cst_39 = arith.constant -1.45315206 : f32
    %62 = vector.broadcast %cst_39 : f32 to vector<8x128xf32>
    %63 = arith.addf %61, %62 : vector<8x128xf32>
    %64 = arith.mulf %63, %59 : vector<8x128xf32>
    %cst_40 = arith.constant 1.42141378 : f32
    %65 = vector.broadcast %cst_40 : f32 to vector<8x128xf32>
    %66 = arith.addf %64, %65 : vector<8x128xf32>
    %67 = arith.mulf %66, %59 : vector<8x128xf32>
    %cst_41 = arith.constant -0.284496725 : f32
    %68 = vector.broadcast %cst_41 : f32 to vector<8x128xf32>
    %69 = arith.addf %67, %68 : vector<8x128xf32>
    %70 = arith.mulf %69, %59 : vector<8x128xf32>
    %cst_42 = arith.constant 0.254829586 : f32
    %71 = vector.broadcast %cst_42 : f32 to vector<8x128xf32>
    %72 = arith.addf %70, %71 : vector<8x128xf32>
    %73 = arith.mulf %72, %59 : vector<8x128xf32>
    %cst_43 = arith.constant 0.000000e+00 : f32
    %74 = vector.broadcast %cst_43 : f32 to vector<8x128xf32>
    %75 = arith.subf %74, %50 : vector<8x128xf32>
    %76 = arith.mulf %75, %50 : vector<8x128xf32>
    %77 = math.exp %76 : vector<8x128xf32>
    %78 = arith.mulf %73, %77 : vector<8x128xf32>
    %cst_44 = arith.constant 1.000000e+00 : f32
    %79 = vector.broadcast %cst_44 : f32 to vector<8x128xf32>
    %80 = arith.subf %79, %78 : vector<8x128xf32>
    %cst_45 = arith.constant 0.000000e+00 : f32
    %81 = vector.broadcast %cst_45 : f32 to vector<8x128xf32>
    %82 = arith.cmpf oge, %49, %81 : vector<8x128xf32>
    %cst_46 = arith.constant 0.000000e+00 : f32
    %83 = vector.broadcast %cst_46 : f32 to vector<8x128xf32>
    %84 = arith.subf %83, %80 : vector<8x128xf32>
    %85 = arith.select %82, %80, %84 : vector<8x128xi1>, vector<8x128xf32>
    %cst_47 = arith.constant 1.000000e+00 : f32
    %86 = vector.broadcast %cst_47 : f32 to vector<8x128xf32>
    %87 = arith.addf %86, %85 : vector<8x128xf32>
    %88 = arith.mulf %47, %87 : vector<8x128xf32>
    %cst_48 = arith.constant dense<0.000000e+00> : vector<8x128xf32>
    %89 = tpu.matmul %12, %88, %cst_48 {dimension_numbers = #tpu.dot_dimension_numbers<[1], [0], [0], [1], [0, 0, 1, 1], [], []>} : vector<8x8xf32>, vector<8x128xf32>, vector<8x128xf32> -> vector<8x128xf32>
    %90 = vector.broadcast %9 : vector<8x1xf32> to vector<8x128xf32>
    %91 = arith.addf %89, %90 : vector<8x128xf32>
    %cst_49 = arith.constant dense<0.000000e+00> : vector<8x128xf32>
    %92 = tpu.matmul %14, %88, %cst_49 {dimension_numbers = #tpu.dot_dimension_numbers<[1], [0], [0], [1], [0, 0, 1, 1], [], []>} : vector<8x8xf32>, vector<8x128xf32>, vector<8x128xf32> -> vector<8x128xf32>
    %c1_i32 = arith.constant 1 : i32
    %93 = tpu.dynamic_rotate %92 by %c1_i32 dim 1 : vector<8x128xf32>, i32 -> vector<8x128xf32>
    %94 = arith.mulf %93, %3 : vector<8x128xf32>
    %95 = arith.addf %91, %94 : vector<8x128xf32>
    %cst_50 = arith.constant dense<0.000000e+00> : vector<8x128xf32>
    %96 = tpu.matmul %15, %88, %cst_50 {dimension_numbers = #tpu.dot_dimension_numbers<[1], [0], [0], [1], [0, 0, 1, 1], [], []>} : vector<8x8xf32>, vector<8x128xf32>, vector<8x128xf32> -> vector<8x128xf32>
    %c127_i32 = arith.constant 127 : i32
    %97 = tpu.dynamic_rotate %96 by %c127_i32 dim 1 : vector<8x128xf32>, i32 -> vector<8x128xf32>
    %98 = arith.mulf %97, %4 : vector<8x128xf32>
    %99 = arith.addf %95, %98 : vector<8x128xf32>
    %cst_51 = arith.constant dense<0.000000e+00> : vector<8x128xf32>
    %100 = tpu.matmul %13, %88, %cst_51 {dimension_numbers = #tpu.dot_dimension_numbers<[1], [0], [0], [1], [0, 0, 1, 1], [], []>} : vector<8x8xf32>, vector<8x128xf32>, vector<8x128xf32> -> vector<8x128xf32>
    %cst_52 = arith.constant dense<0.000000e+00> : vector<8x8xf32>
    %101 = tpu.matmul %99, %1, %cst_52 {dimension_numbers = #tpu.dot_dimension_numbers<[1], [0], [0], [1], [0, 0, 1, 1], [], []>} : vector<8x128xf32>, vector<128x8xf32>, vector<8x8xf32> -> vector<8x8xf32>
    %cst_53 = arith.constant 6.250000e-02 : f32
    %102 = vector.broadcast %cst_53 : f32 to vector<8x8xf32>
    %103 = arith.mulf %101, %102 : vector<8x8xf32>
    %cst_54 = arith.constant dense<0.000000e+00> : vector<8x8xf32>
    %104 = tpu.matmul %100, %1, %cst_54 {dimension_numbers = #tpu.dot_dimension_numbers<[1], [0], [0], [1], [0, 0, 1, 1], [], []>} : vector<8x128xf32>, vector<128x8xf32>, vector<8x8xf32> -> vector<8x8xf32>
    %cst_55 = arith.constant 6.250000e-02 : f32
    %105 = vector.broadcast %cst_55 : f32 to vector<8x8xf32>
    %106 = arith.mulf %104, %105 : vector<8x8xf32>
    %cst_56 = arith.constant dense<0xFF800000> : vector<8xf32>
    %107 = vector.multi_reduction <maximumf>, %103, %cst_56 [0] : vector<8x8xf32> to vector<8xf32>
    %108 = vector.shape_cast %107 : vector<8xf32> to vector<1x8xf32>
    %cst_57 = arith.constant dense<0xFF800000> : vector<8xf32>
    %109 = vector.multi_reduction <maximumf>, %106, %cst_57 [0] : vector<8x8xf32> to vector<8xf32>
    %110 = vector.shape_cast %109 : vector<8xf32> to vector<1x8xf32>
    %111 = arith.maximumf %108, %110 : vector<1x8xf32>
    %112 = vector.broadcast %111 : vector<1x8xf32> to vector<8x8xf32>
    %113 = arith.subf %103, %112 : vector<8x8xf32>
    %114 = math.exp %113 : vector<8x8xf32>
    %115 = vector.broadcast %111 : vector<1x8xf32> to vector<8x8xf32>
    %116 = arith.subf %106, %115 : vector<8x8xf32>
    %117 = math.exp %116 : vector<8x8xf32>
    %cst_58 = arith.constant dense<0.000000e+00> : vector<8xf32>
    %118 = vector.multi_reduction <add>, %114, %cst_58 [0] : vector<8x8xf32> to vector<8xf32>
    %119 = vector.shape_cast %118 : vector<8xf32> to vector<1x8xf32>
    %cst_59 = arith.constant dense<0.000000e+00> : vector<8xf32>
    %120 = vector.multi_reduction <add>, %117, %cst_59 [0] : vector<8x8xf32> to vector<8xf32>
    %121 = vector.shape_cast %120 : vector<8xf32> to vector<1x8xf32>
    %122 = arith.addf %119, %121 : vector<1x8xf32>
    %123 = tpu.reciprocal %122 {approx = true} : vector<1x8xf32> -> vector<1x8xf32>
    %124 = arith.mulf %122, %123 : vector<1x8xf32>
    %cst_60 = arith.constant 2.000000e+00 : f32
    %125 = vector.broadcast %cst_60 : f32 to vector<1x8xf32>
    %126 = arith.subf %125, %124 : vector<1x8xf32>
    %127 = arith.mulf %123, %126 : vector<1x8xf32>
    %128 = vector.broadcast %127 : vector<1x8xf32> to vector<8x8xf32>
    %129 = arith.mulf %114, %128 : vector<8x8xf32>
    %cst_61 = arith.constant dense<0.000000e+00> : vector<8x128xf32>
    %130 = tpu.matmul %129, %2, %cst_61 {dimension_numbers = #tpu.dot_dimension_numbers<[1], [0], [0], [1], [0, 0, 1, 1], [], []>} : vector<8x8xf32>, vector<8x128xf32>, vector<8x128xf32> -> vector<8x128xf32>
    %131 = vector.broadcast %127 : vector<1x8xf32> to vector<8x8xf32>
    %132 = arith.mulf %117, %131 : vector<8x8xf32>
    %cst_62 = arith.constant dense<0.000000e+00> : vector<8x128xf32>
    %133 = tpu.matmul %132, %2, %cst_62 {dimension_numbers = #tpu.dot_dimension_numbers<[1], [0], [0], [1], [0, 0, 1, 1], [], []>} : vector<8x8xf32>, vector<8x128xf32>, vector<8x128xf32> -> vector<8x128xf32>
    %134 = arith.mulf %130, %99 : vector<8x128xf32>
    %135 = arith.mulf %133, %100 : vector<8x128xf32>
    %136 = arith.addf %134, %135 : vector<8x128xf32>
    %c0_63 = arith.constant 0 : index
    %c0_64 = arith.constant 0 : index
    %137 = vector.load %arg6[%c0_63, %c0_64] : memref<8x128xf32, #tpu.memory_space<vmem>>, vector<8x128xf32>
    tpu.vector_store %arg6[%c0_63, %c0_64], %136 {strides = array<i32>} : memref<8x128xf32, #tpu.memory_space<vmem>>, vector<8x128xf32>,
    return
  }
  func.func @transform_0(%arg0: i32) -> (i32, i32) {
    %c0_i32 = arith.constant 0 : i32
    %c0_i32_0 = arith.constant 0 : i32
    return %c0_i32, %arg0 : i32, i32
  }
  func.func @transform_1(%arg0: i32) -> (i32, i32) {
    %c0_i32 = arith.constant 0 : i32
    %c0_i32_0 = arith.constant 0 : i32
    %c0_i32_1 = arith.constant 0 : i32
    return %c0_i32, %c0_i32_0 : i32, i32
  }
  func.func @transform_2(%arg0: i32) -> (i32, i32) {
    %c0_i32 = arith.constant 0 : i32
    %c0_i32_0 = arith.constant 0 : i32
    %c0_i32_1 = arith.constant 0 : i32
    return %c0_i32, %c0_i32_0 : i32, i32
  }
  func.func @transform_3(%arg0: i32) -> (i32, i32) {
    %c0_i32 = arith.constant 0 : i32
    %c0_i32_0 = arith.constant 0 : i32
    %c0_i32_1 = arith.constant 0 : i32
    return %c0_i32, %c0_i32_0 : i32, i32
  }
  func.func @transform_4(%arg0: i32) -> (i32, i32) {
    %c0_i32 = arith.constant 0 : i32
    %c0_i32_0 = arith.constant 0 : i32
    %c0_i32_1 = arith.constant 0 : i32
    return %c0_i32, %c0_i32_0 : i32, i32
  }
  func.func @transform_5(%arg0: i32) -> (i32, i32) {
    %c0_i32 = arith.constant 0 : i32
    %c0_i32_0 = arith.constant 0 : i32
    return %c0_i32, %arg0 : i32, i32
  }
}

</mosaic_0001>

<llo_original>
// kernel: scconv_forward.1
$region0: #{scconv_forward.1}
  #allocation0 [shape = 'u32[]', space=smem, size = 0x4, offset = 0x4, fixed_abs, tag = 'smem constant byte address 0x4 - core index']
  #allocation1 [shape = 'u32[72,128]{1,0:T(1,128)}', space=vmem, size = 0x9000, scoped, tag = 'internal scratch']
  %s0 = inlined_call_operand.vmem [shape: f32[8,256], index: 0, kind: input, shape index: {}]
  %s1 = inlined_call_operand.vmem [shape: f32[8,128], index: 1, kind: input, shape index: {}]
  %s2 = inlined_call_operand.vmem [shape: f32[128,8], index: 2, kind: input, shape index: {}]
  %s3 = inlined_call_operand.vmem [shape: f32[8,128], index: 3, kind: input, shape index: {}]
  %s4 = inlined_call_operand.vmem [shape: f32[16,128], index: 4, kind: input, shape index: {}]
  %s5 = inlined_call_operand.vmem [shape: f32[8,256], index: 5, kind: output, shape index: {}]
  %s6 = sld [smem:[#allocation0]]
  $region53: #{scconv_forward.1} parent=0
    _
  %s8 = ssub.s32 1, %s6
  %s9 = scalar_select 0, %s8, %s6
  loop: start=0, step=1, limit=4
  $region2: #{scconv_forward.1} parent=0 // loop_pre_header
    _
  $region3: #{scconv_forward.1} parent=0 // loop_header
    %s11 = sphi 0, %s15
    %p12 = scmp.ge.s32.totalorder %s11, 4
    %s21 = sphi 0, %s23
    %s24 = sphi 0, %s21
    %s25 = sphi 0, %s24
    %s41 = sphi 0, %s25
    %s45 = sphi 0, %s45
    %s47 = sphi 0, %s45
    %s48 = sphi 0, %s47
    %s62 = sphi 0, %s48
    %s66 = sphi 0, %s66
    %s68 = sphi 0, %s66
    %s69 = sphi 0, %s68
    %s83 = sphi 0, %s69
    %s87 = sphi 0, %s87
    %s89 = sphi 0, %s87
    %s90 = sphi 0, %s89
    %s104 = sphi 0, %s90
    %s108 = sphi 0, %s108
    %s110 = sphi 0, %s108
    %s111 = sphi 0, %s110
    %s125 = sphi 0, %s111
    %s131 = sphi 0, %s133
    %s134 = sphi 0, %s131
    %s135 = sphi 0, %s134
    %s151 = sphi 0, %s135
  $region4: #{scconv_forward.1} parent=0 // loop_header_branch
    %14 = sbr.rel (%p12) target = $region8
  $region5: #{scconv_forward.1} parent=0 // loop_body
    %s16 = ssub.s32 %s11, 1
    %s17 = ssub.s32 %s11, 2
    %s18 = sadd.s32 %s11, 1
    %s19 = ssub.s32 %s11, %s18
    %p20 = scmp.eq.s32.totalorder %s19, 0
    %s22 = sadd.s32 %s21, 1
    %s23 = scalar_select %p20, %s21, %s22
    %p26 = pneg %p20
    %p27 = scmp.eq.s32.totalorder %s11, 1
    %p28 = por %p26, %p27
    %p29 = scmp.ne.s32.totalorder %s21, %s24
    %p30 = scmp.eq.s32.totalorder %s11, 0
    %p31 = por %p29, %p30
    %p32 = scmp.ne.s32.totalorder %s21, %s24
    %p33 = scmp.eq.s32.totalorder %s16, 1
    %p34 = por %p32, %p33
    %p35 = scmp.ne.s32.totalorder %s24, %s25
    %p36 = scmp.eq.s32.totalorder %s16, 0
    %p37 = por %p35, %p36
    %p38 = scmp.ne.s32.totalorder %s24, %s25
    %p39 = scmp.eq.s32.totalorder %s17, 1
    %p40 = por %p38, %p39
    %p42 = scmp.ne.s32.totalorder %s25, %s41
    %p43 = scmp.eq.s32.totalorder %s17, 0
    %p44 = por %p42, %p43
    %s46 = sadd.s32 %s45, 1
    %p49 = scmp.eq.s32.totalorder %s11, 1
    %p50 = scmp.ne.s32.totalorder %s45, %s47
    %p51 = scmp.eq.s32.totalorder %s11, 0
    %p52 = por %p50, %p51
    %p53 = scmp.ne.s32.totalorder %s45, %s47
    %p54 = scmp.eq.s32.totalorder %s16, 1
    %p55 = por %p53, %p54
    %p56 = scmp.ne.s32.totalorder %s47, %s48
    %p57 = scmp.eq.s32.totalorder %s16, 0
    %p58 = por %p56, %p57
    %p59 = scmp.ne.s32.totalorder %s47, %s48
    %p60 = scmp.eq.s32.totalorder %s17, 1
    %p61 = por %p59, %p60
    %p63 = scmp.ne.s32.totalorder %s48, %s62
    %p64 = scmp.eq.s32.totalorder %s17, 0
    %p65 = por %p63, %p64
    %s67 = sadd.s32 %s66, 1
    %p70 = scmp.eq.s32.totalorder %s11, 1
    %p71 = scmp.ne.s32.totalorder %s66, %s68
    %p72 = scmp.eq.s32.totalorder %s11, 0
    %p73 = por %p71, %p72
    %p74 = scmp.ne.s32.totalorder %s66, %s68
    %p75 = scmp.eq.s32.totalorder %s16, 1
    %p76 = por %p74, %p75
    %p77 = scmp.ne.s32.totalorder %s68, %s69
    %p78 = scmp.eq.s32.totalorder %s16, 0
    %p79 = por %p77, %p78
    %p80 = scmp.ne.s32.totalorder %s68, %s69
    %p81 = scmp.eq.s32.totalorder %s17, 1
    %p82 = por %p80, %p81
    %p84 = scmp.ne.s32.totalorder %s69, %s83
    %p85 = scmp.eq.s32.totalorder %s17, 0
    %p86 = por %p84, %p85
    %s88 = sadd.s32 %s87, 1
    %p91 = scmp.eq.s32.totalorder %s11, 1
    %p92 = scmp.ne.s32.totalorder %s87, %s89
    %p93 = scmp.eq.s32.totalorder %s11, 0
    %p94 = por %p92, %p93
    %p95 = scmp.ne.s32.totalorder %s87, %s89
    %p96 = scmp.eq.s32.totalorder %s16, 1
    %p97 = por %p95, %p96
    %p98 = scmp.ne.s32.totalorder %s89, %s90
    %p99 = scmp.eq.s32.totalorder %s16, 0
    %p100 = por %p98, %p99
    %p101 = scmp.ne.s32.totalorder %s89, %s90
    %p102 = scmp.eq.s32.totalorder %s17, 1
    %p103 = por %p101, %p102
    %p105 = scmp.ne.s32.totalorder %s90, %s104
    %p106 = scmp.eq.s32.totalorder %s17, 0
    %p107 = por %p105, %p106
    %s109 = sadd.s32 %s108, 1
    %p112 = scmp.eq.s32.totalorder %s11, 1
    %p113 = scmp.ne.s32.totalorder %s108, %s110
    %p114 = scmp.eq.s32.totalorder %s11, 0
    %p115 = por %p113, %p114
    %p116 = scmp.ne.s32.totalorder %s108, %s110
    %p117 = scmp.eq.s32.totalorder %s16, 1
    %p118 = por %p116, %p117
    %p119 = scmp.ne.s32.totalorder %s110, %s111
    %p120 = scmp.eq.s32.totalorder %s16, 0
    %p121 = por %p119, %p120
    %p122 = scmp.ne.s32.totalorder %s110, %s111
    %p123 = scmp.eq.s32.totalorder %s17, 1
    %p124 = por %p122, %p123
    %p126 = scmp.ne.s32.totalorder %s111, %s125
    %p127 = scmp.eq.s32.totalorder %s17, 0
    %p128 = por %p126, %p127
    %s129 = ssub.s32 %s11, %s18
    %p130 = scmp.eq.s32.totalorder %s129, 0
    %s132 = sadd.s32 %s131, 1
    %s133 = scalar_select %p130, %s131, %s132
    %p136 = pneg %p130
    %p137 = scmp.eq.s32.totalorder %s11, 1
    %p138 = por %p136, %p137
    %p139 = scmp.ne.s32.totalorder %s131, %s134
    %p140 = scmp.eq.s32.totalorder %s11, 0
    %p141 = por %p139, %p140
    %p142 = scmp.ne.s32.totalorder %s131, %s134
    %p143 = scmp.eq.s32.totalorder %s16, 1
    %p144 = por %p142, %p143
    %p145 = scmp.ne.s32.totalorder %s134, %s135
    %p146 = scmp.eq.s32.totalorder %s16, 0
    %p147 = por %p145, %p146
    %p148 = scmp.ne.s32.totalorder %s134, %s135
    %p149 = scmp.eq.s32.totalorder %s17, 1
    %p150 = por %p148, %p149
    %p152 = scmp.ne.s32.totalorder %s135, %s151
    %p153 = scmp.eq.s32.totalorder %s17, 0
    %p154 = por %p152, %p153
    %p155 = scmp.le.s32.totalorder 1, %s11
    %p156 = scmp.lt.s32.totalorder %s11, 3
    %p157 = pnand %p155, %p156
    %p158 = pneg %p157
    // Predicated region
    $region9: #{scconv_forward.1} parent=5 // pred_check
      _
    $region10: #{scconv_forward.1} parent=5 // pred_check_branch
      %160 = sbr.rel (%p157) target = $region12
    $region11: #{scconv_forward.1} parent=5 // pred_region
      %s161 = ssub.s32 %s11, 1
      // Predicated region
      $region13: #{scconv_forward.1} parent=11 // pred_check
        %p162 = pneg %p58
      $region14: #{scconv_forward.1} parent=11 // pred_check_branch
        %164 = sbr.rel (%p162) target = $region16
      $region15: #{scconv_forward.1} parent=11 // pred_region
        _
      $region16: #{scconv_forward.1} parent=11 // pred_fallthru
        _
      // Predicated region
      $region17: #{scconv_forward.1} parent=11 // pred_check
        %p165 = pneg %p79
      $region18: #{scconv_forward.1} parent=11 // pred_check_branch
        %167 = sbr.rel (%p165) target = $region20
      $region19: #{scconv_forward.1} parent=11 // pred_region
        _
      $region20: #{scconv_forward.1} parent=11 // pred_fallthru
        _
      // Predicated region
      $region21: #{scconv_forward.1} parent=11 // pred_check
        %p168 = pneg %p100
      $region22: #{scconv_forward.1} parent=11 // pred_check_branch
        %170 = sbr.rel (%p168) target = $region24
      $region23: #{scconv_forward.1} parent=11 // pred_region
        _
      $region24: #{scconv_forward.1} parent=11 // pred_fallthru
        _
      // Predicated region
      $region25: #{scconv_forward.1} parent=11 // pred_check
        %p171 = pneg %p121
      $region26: #{scconv_forward.1} parent=11 // pred_check_branch
        %173 = sbr.rel (%p171) target = $region28
      $region27: #{scconv_forward.1} parent=11 // pred_region
        _
      $region28: #{scconv_forward.1} parent=11 // pred_fallthru
        _
    $region12: #{scconv_forward.1} parent=5 // pred_fallthru
      _
    %p174 = scmp.lt.s32.totalorder %s11, 2
    // Predicated region
    $region29: #{scconv_forward.1} parent=5 // pred_check
      %p175 = pneg %p174
    $region30: #{scconv_forward.1} parent=5 // pred_check_branch
      %177 = sbr.rel (%p175) target = $region32
    $region31: #{scconv_forward.1} parent=5 // pred_region
      // Predicated region
      $region33: #{scconv_forward.1} parent=31 // pred_check
        %p178 = pneg %p31
      $region34: #{scconv_forward.1} parent=31 // pred_check_branch
        %180 = sbr.rel (%p178) target = $region36
      $region35: #{scconv_forward.1} parent=31 // pred_region
        %p181 = scmp.lt.s32.totalorder %s11, 1
        %s182 = scalar_select %p181, %s11, 1
        %s183 = smul.addr %s182, 8
        %s184 = scalar_lea.vmem %s0, %s183
      $region36: #{scconv_forward.1} parent=31 // pred_fallthru
        _
    $region32: #{scconv_forward.1} parent=5 // pred_fallthru
      _
    %p185 = scmp.le.s32.totalorder 1, %s11
    %p186 = scmp.lt.s32.totalorder %s11, 3
    %p187 = pnand %p185, %p186
    %p188 = pneg %p187
    // Predicated region
    $region37: #{scconv_forward.1} parent=5 // pred_check
      _
    $region38: #{scconv_forward.1} parent=5 // pred_check_branch
      %190 = sbr.rel (%p187) target = $region40
    $region39: #{scconv_forward.1} parent=5 // pred_region
      %s191 = ssub.s32 %s11, 1
      %p192 = scmp.lt.s32.totalorder %s16, 1
      %s193 = scalar_select %p192, %s16, 1
      %s194 = smul.addr %s193, 8
      %s195 = scalar_lea.vmem %s0, %s194
      %p196 = pneg %p37
      %p197 = pneg %p34
      %p198 = pneg %p58
      %p199 = pneg %p55
      %p200 = pneg %p79
      %p201 = pneg %p76
      %p202 = pneg %p100
      %p203 = pneg %p97
      %p204 = pneg %p121
      %p205 = pneg %p118
      %p206 = pneg %p147
      %p207 = pneg %p144
      %p208 = scmp.lt.s32.totalorder %s16, 1
      %s209 = scalar_select %p208, %s16, 1
      %s210 = smul.addr %s209, 8
      %s211 = scalar_lea.vmem %s5, %s210
      %p212 = scmp.lt.s32.totalorder %s16, 1
      %s213 = scalar_select %p212, %s16, 1
      %s214 = smul.addr %s213, 8
      %s215 = scalar_lea.vmem %s0, %s214
      %p216 = scmp.lt.s32.totalorder %s16, 1
      %s217 = scalar_select %p216, %s16, 1
      %s218 = smul.addr %s217, 8
      %s219 = scalar_lea.vmem %s5, %s218
      %v220 = vld [vmem:[%s215] sm:$0xff]
      %v221 = vld [vmem:[%s2] sm:$0xff]
      %v222 = vld [vmem:[%s2 + $0x8] sm:$0xff]
      %v223 = vld [vmem:[%s2 + $0x10] sm:$0xff]
      %v224 = vld [vmem:[%s2 + $0x18] sm:$0xff]
      %v225 = vld [vmem:[%s2 + $0x20] sm:$0xff]
      %v226 = vld [vmem:[%s2 + $0x28] sm:$0xff]
      %v227 = vld [vmem:[%s2 + $0x30] sm:$0xff]
      %v228 = vld [vmem:[%s2 + $0x38] sm:$0xff]
      %v229 = vld [vmem:[%s2 + $0x40] sm:$0xff]
      %v230 = vld [vmem:[%s2 + $0x48] sm:$0xff]
      %v231 = vld [vmem:[%s2 + $0x50] sm:$0xff]
      %v232 = vld [vmem:[%s2 + $0x58] sm:$0xff]
      %v233 = vld [vmem:[%s2 + $0x60] sm:$0xff]
      %v234 = vld [vmem:[%s2 + $0x68] sm:$0xff]
      %v235 = vld [vmem:[%s2 + $0x70] sm:$0xff]
      %v236 = vld [vmem:[%s2 + $0x78] sm:$0xff]
      %v237 = vld [vmem:[%s3] sm:$0xff]
      %v238 = vld [vmem:[%s4] sm:$0xff]
      %v239 = vld [vmem:[%s4 + $0x8] sm:$0xff]
      %v240 = vld [vmem:[%s1] sm:$0xff]
      %241 = vmatpush.msra.mxu0 %v236
      %242 = vmatpush.msra.mxu0 %v235
      %243 = vmatpush.msra.mxu0 %v234
      %244 = vmatpush.msra.mxu0 %v233
      %245 = vmatpush.msra.mxu0 %v232
      %246 = vmatpush.msra.mxu0 %v231
      %247 = vmatpush.msra.mxu0 %v230
      %248 = vmatpush.msra.mxu0 %v229
      %249 = vmatpush.msra.mxu0 %v228
      %250 = vmatpush.msra.mxu0 %v227
      %251 = vmatpush.msra.mxu0 %v226
      %252 = vmatpush.msra.mxu0 %v225
      %253 = vmatpush.msra.mxu0 %v224
      %254 = vmatpush.msra.mxu0 %v223
      %255 = vmatpush.msra.mxu0 %v222
      %256 = vmatpush.msra.mxu0 %v221
      %257 = vmatmul.f32.gmra.mxu0 %v220
      %v258 = vpop.f32.mrf.mxu0
      %v259 = vadd.f32 0.0, %v258
      %260 = vdwg.mxu0
      %262 = vrot.lane.b32.xlu0 %v240, 72
      %v263 = vpop.permute.xlu0 %262
      %vm264 = vcmask 64512
      %v265 = vsel %vm264, %v263, 0
      %267 = vmatpush.msra.mxu0 0.0
      %268 = vmatpush.msra.mxu0 0.0
      %269 = vmatpush.msra.mxu0 0.0
      %270 = vmatpush.msra.mxu0 0.0
      %271 = vmatpush.msra.mxu0 0.0
      %272 = vmatpush.msra.mxu0 0.0
      %273 = vmatpush.msra.mxu0 0.0
      %274 = vmatpush.msra.mxu0 0.0
      %275 = vmatpush.msra.mxu0 0.0
      %276 = vmatpush.msra.mxu0 0.0
      %277 = vmatpush.msra.mxu0 0.0
      %278 = vmatpush.msra.mxu0 0.0
      %279 = vmatpush.msra.mxu0 0.0
      %280 = vmatpush.msra.mxu0 0.0
      %281 = vmatpush.msra.mxu0 0.0
      %282 = vmatpush.msra.mxu0 %v259
      %283 = vmatmul.f32.gmra.mxu0 %v265
      %v284 = vpop.f32.mrf.mxu0
      %v285 = vadd.f32 0.0, %v284
      %286 = vdwg.mxu0
      %v288 = vsel %vm264, %v285, 0
      %290 = vmatpush.msra.mxu0 0.0
      %291 = vmatpush.msra.mxu0 0.0
      %292 = vmatpush.msra.mxu0 0.0
      %293 = vmatpush.msra.mxu0 0.0
      %294 = vmatpush.msra.mxu0 0.0
      %295 = vmatpush.msra.mxu0 0.0
      %296 = vmatpush.msra.mxu0 0.0
      %297 = vmatpush.msra.mxu0 0.0
      %298 = vmatpush.msra.mxu0 0.0
      %299 = vmatpush.msra.mxu0 0.0
      %300 = vmatpush.msra.mxu0 0.0
      %301 = vmatpush.msra.mxu0 0.0
      %302 = vmatpush.msra.mxu0 0.0
      %303 = vmatpush.msra.mxu0 0.0
      %304 = vmatpush.msra.mxu0 0.0
      %305 = vmatpush.msra.mxu0 %v237
      %306 = vmatmul.f32.gmra.mxu0 %v288
      %v307 = vpop.f32.mrf.mxu0
      %v308 = vadd.f32 0.0, %v307
      %309 = vdwg.mxu0
      %v310 = vsub.f32 %v220, %v308
      %v311 = vmul.f32 %v310, %v310
      %312 = vmatpush.msra.mxu0 %v236
      %313 = vmatpush.msra.mxu0 %v235
      %314 = vmatpush.msra.mxu0 %v234
      %315 = vmatpush.msra.mxu0 %v233
      %316 = vmatpush.msra.mxu0 %v232
      %317 = vmatpush.msra.mxu0 %v231
      %318 = vmatpush.msra.mxu0 %v230
      %319 = vmatpush.msra.mxu0 %v229
      %320 = vmatpush.msra.mxu0 %v228
      %321 = vmatpush.msra.mxu0 %v227
      %322 = vmatpush.msra.mxu0 %v226
      %323 = vmatpush.msra.mxu0 %v225
      %324 = vmatpush.msra.mxu0 %v224
      %325 = vmatpush.msra.mxu0 %v223
      %326 = vmatpush.msra.mxu0 %v222
      %327 = vmatpush.msra.mxu0 %v221
      %328 = vmatmul.f32.gmra.mxu0 %v311
      %v329 = vpop.f32.mrf.mxu0
      %v330 = vadd.f32 0.0, %v329
      %331 = vdwg.mxu0
      %332 = vrot.lane.b32.xlu0 %v240, 64
      %v333 = vpop.permute.xlu0 %332
      %v334 = vsel %vm264, %v333, 0
      %336 = vmatpush.msra.mxu0 0.0
      %337 = vmatpush.msra.mxu0 0.0
      %338 = vmatpush.msra.mxu0 0.0
      %339 = vmatpush.msra.mxu0 0.0
      %340 = vmatpush.msra.mxu0 0.0
      %341 = vmatpush.msra.mxu0 0.0
      %342 = vmatpush.msra.mxu0 0.0
      %343 = vmatpush.msra.mxu0 0.0
      %344 = vmatpush.msra.mxu0 0.0
      %345 = vmatpush.msra.mxu0 0.0
      %346 = vmatpush.msra.mxu0 0.0
      %347 = vmatpush.msra.mxu0 0.0
      %348 = vmatpush.msra.mxu0 0.0
      %349 = vmatpush.msra.mxu0 0.0
      %350 = vmatpush.msra.mxu0 0.0
      %351 = vmatpush.msra.mxu0 %v330
      %352 = vmatmul.f32.gmra.mxu0 %v334
      %v353 = vpop.f32.mrf.mxu0
      %v354 = vadd.f32 0.0, %v353
      %355 = vdwg.mxu0
      %v356 = vrsqrt.pop %v354
      %v357 = vmul.f32 %v356, %v354
      %v358 = vmul.f32 %v357, %v356
      %v359 = vmul.f32 0.5, %v358
      %v360 = vsub.f32 1.5, %v359
      %v361 = vmul.f32 %v356, %v360
      %v362 = vmul.f32 %v354, %v361
      %vm363 = vcmp.eq.f32.partialorder %v354, inf
      %v364 = vsel %vm363, %v354, %v362
      %vm365 = vcmp.eq.f32.partialorder %v354, 0.0
      %v366 = vand.u32 %v354, 2147483648
      %v367 = vsel %vm365, %v366, %v364
      %v368 = vadd.f32 %v367, 1e-10
      %369 = vset.pattern.permute.xlu0 0
      %370 = vperm.xlu0 %369, %v240
      %v371 = vpop.permute.xlu0 %370
      %v373 = vrcp.pop %v368
      %v374 = vmul.f32 %v368, %v373
      %v375 = vsub.f32 1.0, %v374
      %v376 = vmul.f32 %v373, %v375
      %v377 = vadd.f32 %v373, %v376
      %vm378 = vweird.f32 %v368
      %vm379 = vweird.f32 %v373
      %vm380 = vmor %vm378, %vm379
      %v381 = vsel %vm380, %v373, %v377
      %v382 = vand.u32 2147483647, %v368
      %vm383 = vcmp.eq.f32.partialorder %v382, 8.507059e+37
      %v384 = vand.u32 %v368, 2147483648
      %v385 = vor.u32 1.1754944e-38, %v384
      %v386 = vsel %vm383, %v385, %v381
      %v387 = vmul.f32 %v371, %v386
      %v389 = vsel %vm264, %v387, 0
      %391 = vmatpush.msra.mxu0 0.0
      %392 = vmatpush.msra.mxu0 0.0
      %393 = vmatpush.msra.mxu0 0.0
      %394 = vmatpush.msra.mxu0 0.0
      %395 = vmatpush.msra.mxu0 0.0
      %396 = vmatpush.msra.mxu0 0.0
      %397 = vmatpush.msra.mxu0 0.0
      %398 = vmatpush.msra.mxu0 0.0
      %399 = vmatpush.msra.mxu0 0.0
      %400 = vmatpush.msra.mxu0 0.0
      %401 = vmatpush.msra.mxu0 0.0
      %402 = vmatpush.msra.mxu0 0.0
      %403 = vmatpush.msra.mxu0 0.0
      %404 = vmatpush.msra.mxu0 0.0
      %405 = vmatpush.msra.mxu0 0.0
      %406 = vmatpush.msra.mxu0 %v237
      %407 = vmatmul.f32.gmra.mxu0 %v389
      %v408 = vpop.f32.mrf.mxu0
      %v409 = vadd.f32 0.0, %v408
      %410 = vdwg.mxu0
      %v411 = vmul.f32 %v310, %v409
      %412 = vset.pattern.permute.xlu0 1
      %413 = vperm.xlu0 %412, %v240
      %v414 = vpop.permute.xlu0 %413
      %v416 = vadd.f32 %v411, %v414
      %417 = vset.pattern.permute.xlu0 2
      %418 = vperm.xlu0 %417, %v240
      %v419 = vpop.permute.xlu0 %418
      %v421 = vmul.f32 %v416, %v419
      %vm422 = vcmp.ge.f32.partialorder %v421, 0.0
      %v423 = vsel %vm422, %v416, 0.0
      %v424 = vsub.f32 %v416, %v423
      %425 = vrot.lane.b32.xlu0 %v240, 112
      %v426 = vpop.permute.xlu0 %425
      %v427 = vsel %vm264, %v426, 0
      %429 = vmatpush.msra.mxu0 0.0
      %430 = vmatpush.msra.mxu0 0.0
      %431 = vmatpush.msra.mxu0 0.0
      %432 = vmatpush.msra.mxu0 0.0
      %433 = vmatpush.msra.mxu0 0.0
      %434 = vmatpush.msra.mxu0 0.0
      %435 = vmatpush.msra.mxu0 0.0
      %436 = vmatpush.msra.mxu0 0.0
      %437 = vmatpush.msra.mxu0 0.0
      %438 = vmatpush.msra.mxu0 0.0
      %439 = vmatpush.msra.mxu0 0.0
      %440 = vmatpush.msra.mxu0 0.0
      %441 = vmatpush.msra.mxu0 0.0
      %442 = vmatpush.msra.mxu0 0.0
      %443 = vmatpush.msra.mxu0 0.0
      %444 = vmatpush.msra.mxu0 %v424
      %445 = vmatmul.f32.gmra.mxu0 %v427
      %v446 = vpop.f32.mrf.mxu0
      %v447 = vadd.f32 0.0, %v446
      %448 = vdwg.mxu0
      %449 = vrot.lane.b32.xlu0 %v240, 120
      %v450 = vpop.permute.xlu0 %449
      %v451 = vsel %vm264, %v450, 0
      %453 = vmatpush.msra.mxu0 0.0
      %454 = vmatpush.msra.mxu0 0.0
      %455 = vmatpush.msra.mxu0 0.0
      %456 = vmatpush.msra.mxu0 0.0
      %457 = vmatpush.msra.mxu0 0.0
      %458 = vmatpush.msra.mxu0 0.0
      %459 = vmatpush.msra.mxu0 0.0
      %460 = vmatpush.msra.mxu0 0.0
      %461 = vmatpush.msra.mxu0 0.0
      %462 = vmatpush.msra.mxu0 0.0
      %463 = vmatpush.msra.mxu0 0.0
      %464 = vmatpush.msra.mxu0 0.0
      %465 = vmatpush.msra.mxu0 0.0
      %466 = vmatpush.msra.mxu0 0.0
      %467 = vmatpush.msra.mxu0 0.0
      %468 = vmatpush.msra.mxu0 %v423
      %469 = vmatmul.f32.gmra.mxu0 %v451
      %v470 = vpop.f32.mrf.mxu0
      %v471 = vadd.f32 %v447, %v470
      %472 = vdwg.mxu0
      %473 = vset.pattern.permute.xlu0 3
      %474 = vperm.xlu0 %473, %v240
      %v475 = vpop.permute.xlu0 %474
      %v477 = vadd.f32 %v471, %v475
      %v478 = vmul.f32 %v477, 0.5
      %v479 = vmul.f32 %v477, 0.70710677
      %v480 = vand.u32 2147483647, %v479
      %v481 = vmul.f32 %v480, 0.3275911
      %v482 = vadd.f32 %v481, 1.0
      %v483 = vrcp.pop %v482
      %v484 = vmul.f32 %v482, %v483
      %v485 = vsub.f32 2.0, %v484
      %v486 = vmul.f32 %v483, %v485
      %v487 = vmul.f32 %v486, 1.0614054
      %v488 = vadd.f32 %v487, -1.4531521
      %v489 = vmul.f32 %v488, %v486
      %v490 = vadd.f32 %v489, 1.4214138
      %v491 = vmul.f32 %v490, %v486
      %v492 = vadd.f32 %v491, -0.28449672
      %v493 = vmul.f32 %v492, %v486
      %v494 = vadd.f32 %v493, 0.2548296
      %v495 = vmul.f32 %v494, %v486
      %v496 = vsub.f32 0.0, %v480
      %v497 = vmul.f32 %v496, %v480
      %v498 = vmul.f32 %v497, 1.442695
      %v499 = vpow.pop %v498
      %v500 = vmul.f32 %v495, %v499
      %v501 = vsub.f32 1.0, %v500
      %vm502 = vcmp.ge.f32.partialorder %v479, 0.0
      %v503 = vsub.f32 0.0, %v501
      %v504 = vsel %vm502, %v501, %v503
      %v505 = vadd.f32 %v504, 1.0
      %v506 = vmul.f32 %v478, %v505
      %507 = vset.pattern.permute.xlu0 4
      %508 = vperm.xlu0 %507, %v240
      %v509 = vpop.permute.xlu0 %508
      %511 = vrot.lane.b32.xlu0 %v240, 104
      %v512 = vpop.permute.xlu0 %511
      %v513 = vsel %vm264, %v512, 0
      %515 = vmatpush.msra.mxu0 0.0
      %516 = vmatpush.msra.mxu0 0.0
      %517 = vmatpush.msra.mxu0 0.0
      %518 = vmatpush.msra.mxu0 0.0
      %519 = vmatpush.msra.mxu0 0.0
      %520 = vmatpush.msra.mxu0 0.0
      %521 = vmatpush.msra.mxu0 0.0
      %522 = vmatpush.msra.mxu0 0.0
      %523 = vmatpush.msra.mxu0 0.0
      %524 = vmatpush.msra.mxu0 0.0
      %525 = vmatpush.msra.mxu0 0.0
      %526 = vmatpush.msra.mxu0 0.0
      %527 = vmatpush.msra.mxu0 0.0
      %528 = vmatpush.msra.mxu0 0.0
      %529 = vmatpush.msra.mxu0 0.0
      %530 = vmatpush.msra.mxu0 %v506
      %531 = vmatmul.f32.gmra.mxu0 %v513
      %v532 = vpop.f32.mrf.mxu0
      %v533 = vadd.f32 %v509, %v532
      %534 = vdwg.mxu0
      %535 = vrot.lane.b32.xlu0 %v240, 88
      %v536 = vpop.permute.xlu0 %535
      %v537 = vsel %vm264, %v536, 0
      %539 = vmatpush.msra.mxu0 0.0
      %540 = vmatpush.msra.mxu0 0.0
      %541 = vmatpush.msra.mxu0 0.0
      %542 = vmatpush.msra.mxu0 0.0
      %543 = vmatpush.msra.mxu0 0.0
      %544 = vmatpush.msra.mxu0 0.0
      %545 = vmatpush.msra.mxu0 0.0
      %546 = vmatpush.msra.mxu0 0.0
      %547 = vmatpush.msra.mxu0 0.0
      %548 = vmatpush.msra.mxu0 0.0
      %549 = vmatpush.msra.mxu0 0.0
      %550 = vmatpush.msra.mxu0 0.0
      %551 = vmatpush.msra.mxu0 0.0
      %552 = vmatpush.msra.mxu0 0.0
      %553 = vmatpush.msra.mxu0 0.0
      %554 = vmatpush.msra.mxu0 %v506
      %555 = vmatmul.f32.gmra.mxu0 %v537
      %v556 = vpop.f32.mrf.mxu0
      %v557 = vadd.f32 0.0, %v556
      %558 = vdwg.mxu0
      %559 = vrot.lane.b32.xlu0 %v557, 1
      %v560 = vpop.permute.xlu0 %559
      %v561 = vmul.f32 %v560, %v238
      %v562 = vadd.f32 %v533, %v561
      %563 = vrot.lane.b32.xlu0 %v240, 80
      %v564 = vpop.permute.xlu0 %563
      %v565 = vsel %vm264, %v564, 0
      %567 = vmatpush.msra.mxu0 0.0
      %568 = vmatpush.msra.mxu0 0.0
      %569 = vmatpush.msra.mxu0 0.0
      %570 = vmatpush.msra.mxu0 0.0
      %571 = vmatpush.msra.mxu0 0.0
      %572 = vmatpush.msra.mxu0 0.0
      %573 = vmatpush.msra.mxu0 0.0
      %574 = vmatpush.msra.mxu0 0.0
      %575 = vmatpush.msra.mxu0 0.0
      %576 = vmatpush.msra.mxu0 0.0
      %577 = vmatpush.msra.mxu0 0.0
      %578 = vmatpush.msra.mxu0 0.0
      %579 = vmatpush.msra.mxu0 0.0
      %580 = vmatpush.msra.mxu0 0.0
      %581 = vmatpush.msra.mxu0 0.0
      %582 = vmatpush.msra.mxu0 %v506
      %583 = vmatmul.f32.gmra.mxu0 %v565
      %v584 = vpop.f32.mrf.mxu0
      %v585 = vadd.f32 0.0, %v584
      %586 = vdwg.mxu0
      %587 = vrot.lane.b32.xlu0 %v585, 127
      %v588 = vpop.permute.xlu0 %587
      %v589 = vmul.f32 %v588, %v239
      %v590 = vadd.f32 %v562, %v589
      %591 = vrot.lane.b32.xlu0 %v240, 96
      %v592 = vpop.permute.xlu0 %591
      %v593 = vsel %vm264, %v592, 0
      %595 = vmatpush.msra.mxu0 0.0
      %596 = vmatpush.msra.mxu0 0.0
      %597 = vmatpush.msra.mxu0 0.0
      %598 = vmatpush.msra.mxu0 0.0
      %599 = vmatpush.msra.mxu0 0.0
      %600 = vmatpush.msra.mxu0 0.0
      %601 = vmatpush.msra.mxu0 0.0
      %602 = vmatpush.msra.mxu0 0.0
      %603 = vmatpush.msra.mxu0 0.0
      %604 = vmatpush.msra.mxu0 0.0
      %605 = vmatpush.msra.mxu0 0.0
      %606 = vmatpush.msra.mxu0 0.0
      %607 = vmatpush.msra.mxu0 0.0
      %608 = vmatpush.msra.mxu0 0.0
      %609 = vmatpush.msra.mxu0 0.0
      %610 = vmatpush.msra.mxu0 %v506
      %611 = vmatmul.f32.gmra.mxu0 %v593
      %v612 = vpop.f32.mrf.mxu0
      %v613 = vadd.f32 0.0, %v612
      %614 = vdwg.mxu0
      %615 = vmatpush.msra.mxu0 %v236
      %616 = vmatpush.msra.mxu0 %v235
      %617 = vmatpush.msra.mxu0 %v234
      %618 = vmatpush.msra.mxu0 %v233
      %619 = vmatpush.msra.mxu0 %v232
      %620 = vmatpush.msra.mxu0 %v231
      %621 = vmatpush.msra.mxu0 %v230
      %622 = vmatpush.msra.mxu0 %v229
      %623 = vmatpush.msra.mxu0 %v228
      %624 = vmatpush.msra.mxu0 %v227
      %625 = vmatpush.msra.mxu0 %v226
      %626 = vmatpush.msra.mxu0 %v225
      %627 = vmatpush.msra.mxu0 %v224
      %628 = vmatpush.msra.mxu0 %v223
      %629 = vmatpush.msra.mxu0 %v222
      %630 = vmatpush.msra.mxu0 %v221
      %631 = vmatmul.f32.gmra.mxu0 %v590
      %v632 = vpop.f32.mrf.mxu0
      %v633 = vadd.f32 0.0, %v632
      %634 = vdwg.mxu0
      %v635 = vmul.f32 %v633, 0.0625
      %636 = vmatpush.msra.mxu0 %v236
      %637 = vmatpush.msra.mxu0 %v235
      %638 = vmatpush.msra.mxu0 %v234
      %639 = vmatpush.msra.mxu0 %v233
      %640 = vmatpush.msra.mxu0 %v232
      %641 = vmatpush.msra.mxu0 %v231
      %642 = vmatpush.msra.mxu0 %v230
      %643 = vmatpush.msra.mxu0 %v229
      %644 = vmatpush.msra.mxu0 %v228
      %645 = vmatpush.msra.mxu0 %v227
      %646 = vmatpush.msra.mxu0 %v226
      %647 = vmatpush.msra.mxu0 %v225
      %648 = vmatpush.msra.mxu0 %v224
      %649 = vmatpush.msra.mxu0 %v223
      %650 = vmatpush.msra.mxu0 %v222
      %651 = vmatpush.msra.mxu0 %v221
      %652 = vmatmul.f32.gmra.mxu0 %v613
      %v653 = vpop.f32.mrf.mxu0
      %v654 = vadd.f32 0.0, %v653
      %655 = vdwg.mxu0
      %v656 = vmul.f32 %v654, 0.0625
      %v657 = vsel %vm264, %v635, -inf
      %v658 = vrot.slane %v657, 4
      %v659 = vmax.f32 %v657, %v658
      %v660 = vrot.slane %v659, 2
      %v661 = vmax.f32 %v659, %v660
      %v662 = vrot.slane %v661, 1
      %v663 = vmax.f32 %v661, %v662
      %v664 = vsel %vm264, %v656, -inf
      %v665 = vrot.slane %v664, 4
      %v666 = vmax.f32 %v664, %v665
      %v667 = vrot.slane %v666, 2
      %v668 = vmax.f32 %v666, %v667
      %v669 = vrot.slane %v668, 1
      %v670 = vmax.f32 %v668, %v669
      %v671 = vmax.f32 %v663, %v670
      %v672 = vsub.f32 %v635, %v671
      %v673 = vmul.f32 %v672, 1.442695
      %v674 = vpow.pop %v673
      %v675 = vsub.f32 %v656, %v671
      %v676 = vmul.f32 %v675, 1.442695
      %v677 = vpow.pop %v676
      %v678 = vsel %vm264, %v674, 0.0
      %v679 = vrot.slane %v678, 4
      %v680 = vadd.f32 %v678, %v679
      %v681 = vrot.slane %v680, 2
      %v682 = vadd.f32 %v680, %v681
      %v683 = vrot.slane %v682, 1
      %v684 = vadd.f32 %v682, %v683
      %v685 = vsel %vm264, %v677, 0.0
      %v686 = vrot.slane %v685, 4
      %v687 = vadd.f32 %v685, %v686
      %v688 = vrot.slane %v687, 2
      %v689 = vadd.f32 %v687, %v688
      %v690 = vrot.slane %v689, 1
      %v691 = vadd.f32 %v689, %v690
      %v692 = vadd.f32 %v684, %v691
      %v693 = vrcp.pop %v692
      %v694 = vmul.f32 %v692, %v693
      %v695 = vsub.f32 2.0, %v694
      %v696 = vmul.f32 %v693, %v695
      %v697 = vmul.f32 %v674, %v696
      %v699 = vsel %vm264, %v697, 0
      %701 = vmatpush.msra.mxu0 0.0
      %702 = vmatpush.msra.mxu0 0.0
      %703 = vmatpush.msra.mxu0 0.0
      %704 = vmatpush.msra.mxu0 0.0
      %705 = vmatpush.msra.mxu0 0.0
      %706 = vmatpush.msra.mxu0 0.0
      %707 = vmatpush.msra.mxu0 0.0
      %708 = vmatpush.msra.mxu0 0.0
      %709 = vmatpush.msra.mxu0 0.0
      %710 = vmatpush.msra.mxu0 0.0
      %711 = vmatpush.msra.mxu0 0.0
      %712 = vmatpush.msra.mxu0 0.0
      %713 = vmatpush.msra.mxu0 0.0
      %714 = vmatpush.msra.mxu0 0.0
      %715 = vmatpush.msra.mxu0 0.0
      %716 = vmatpush.msra.mxu0 %v237
      %717 = vmatmul.f32.gmra.mxu0 %v699
      %v718 = vpop.f32.mrf.mxu0
      %v719 = vadd.f32 0.0, %v718
      %720 = vdwg.mxu0
      %v721 = vmul.f32 %v677, %v696
      %v723 = vsel %vm264, %v721, 0
      %725 = vmatpush.msra.mxu0 0.0
      %726 = vmatpush.msra.mxu0 0.0
      %727 = vmatpush.msra.mxu0 0.0
      %728 = vmatpush.msra.mxu0 0.0
      %729 = vmatpush.msra.mxu0 0.0
      %730 = vmatpush.msra.mxu0 0.0
      %731 = vmatpush.msra.mxu0 0.0
      %732 = vmatpush.msra.mxu0 0.0
      %733 = vmatpush.msra.mxu0 0.0
      %734 = vmatpush.msra.mxu0 0.0
      %735 = vmatpush.msra.mxu0 0.0
      %736 = vmatpush.msra.mxu0 0.0
      %737 = vmatpush.msra.mxu0 0.0
      %738 = vmatpush.msra.mxu0 0.0
      %739 = vmatpush.msra.mxu0 0.0
      %740 = vmatpush.msra.mxu0 %v237
      %741 = vmatmul.f32.gmra.mxu0 %v723
      %v742 = vpop.f32.mrf.mxu0
      %v743 = vadd.f32 0.0, %v742
      %744 = vdwg.mxu0
      %v745 = vmul.f32 %v719, %v590
      %v746 = vmul.f32 %v743, %v613
      %v747 = vadd.f32 %v745, %v746
      %748 = vst [vmem:[%s219] sm:$0xff] %v747
      %p749 = scmp.lt.s32.totalorder %s16, 1
      %s750 = scalar_select %p749, %s16, 1
      %s751 = smul.addr %s750, 8
      %s752 = scalar_lea.vmem %s5, %s751
      // Predicated region
      $region41: #{scconv_forward.1} parent=39 // pred_check
        %p753 = pneg %p144
      $region42: #{scconv_forward.1} parent=39 // pred_check_branch
        %755 = sbr.rel (%p753) target = $region44
      $region43: #{scconv_forward.1} parent=39 // pred_region
        _
      $region44: #{scconv_forward.1} parent=39 // pred_fallthru
        _
    $region40: #{scconv_forward.1} parent=5 // pred_fallthru
      _
    %p756 = scmp.le.s32.totalorder 2, %s11
    // Predicated region
    $region45: #{scconv_forward.1} parent=5 // pred_check
      %p757 = pneg %p756
    $region46: #{scconv_forward.1} parent=5 // pred_check_branch
      %759 = sbr.rel (%p757) target = $region48
    $region47: #{scconv_forward.1} parent=5 // pred_region
      %s760 = ssub.s32 %s11, 2
      // Predicated region
      $region49: #{scconv_forward.1} parent=47 // pred_check
        %p761 = pneg %p150
      $region50: #{scconv_forward.1} parent=47 // pred_check_branch
        %763 = sbr.rel (%p761) target = $region52
      $region51: #{scconv_forward.1} parent=47 // pred_region
        %p764 = scmp.lt.s32.totalorder %s17, 1
        %s765 = scalar_select %p764, %s17, 1
        %s766 = smul.addr %s765, 8
        %s767 = scalar_lea.vmem %s5, %s766
      $region52: #{scconv_forward.1} parent=47 // pred_fallthru
        _
    $region48: #{scconv_forward.1} parent=5 // pred_fallthru
      _
  $region6: #{scconv_forward.1} parent=0 // loop_footer
    %s15 = sadd.s32 1, %s11
  $region7: #{scconv_forward.1} parent=0 // loop_footer_branch
    %10 = sbr.rel target = $region3
  $region8: #{scconv_forward.1} parent=0 // loop_exit
    _

</llo_original>
